<compile_context>
chip_gen: v7x
topology: tpu7x:2x2x1
jax: 0.10.0
libtpu: 0.0.40
codegen_flags: <defaults>
</compile_context>

<pallas_src>
from functools import partial

import jax
import jax.numpy as jnp
from jax.experimental import pallas as pl
from jax.experimental.pallas import tpu as pltpu


def _round_up(x, m):
    return (x + m - 1) // m * m


def _resident_spec(shape):
    """BlockSpec for an operand that is DMA'd once and stays resident across the
    batch grid (constant index_map).  Single-buffered when the installed Pallas
    supports per-spec pipeline_mode; default double-buffering otherwise."""
    index_map = lambda i: (0,) * len(shape)
    if hasattr(pl, "Buffered"):
        try:
            return pl.BlockSpec(shape, index_map, pipeline_mode=pl.Buffered(1))
        except TypeError:  # BlockSpec without pipeline_mode kwarg
            pass
    return pl.BlockSpec(shape, index_map)


def _critic_kernel(xa_ref, w_first_ref, w_rest_ref, bias_ref, q_ref):
    Hp = w_rest_ref.shape[-1]          # hidden dim, padded to a multiple of 128
    wdt = w_first_ref.dtype            # weight storage dtype; accumulate in f32

    # Fused linear1 / linear_action: block-diagonal weight gives the (TB, 2Hp)
    # "concatenated" hidden straight out of the MXU -- no lane-axis concat.
    xa = xa_ref[...].astype(wdt)
    h = jnp.dot(xa, w_first_ref[...], preferred_element_type=jnp.float32)
    h = jnp.maximum(h + bias_ref[0:1, :], 0.0)

    # linear2: single K=2Hp matmul directly on the contiguous hidden.
    h2 = jnp.dot(h.astype(wdt), w_rest_ref[0:2 * Hp, :],
                 preferred_element_type=jnp.float32)
    h2 = jnp.maximum(h2 + bias_ref[1:2, 0:Hp], 0.0)

    # linear3 + relu.
    h3 = jnp.dot(h2.astype(wdt), w_rest_ref[2 * Hp:3 * Hp, :],
                 preferred_element_type=jnp.float32)
    h3 = jnp.maximum(h3 + bias_ref[2:3, 0:Hp], 0.0)

    # Q head as VPU multiply + XLU lane reduction (wq kept f32 in the bias pack);
    # avoids an MXU pass whose 127/128 output columns would be discarded.
    wq_row = bias_ref[3:4, 0:Hp]
    q = jnp.sum(h3 * wq_row, axis=-1, keepdims=True) + bias_ref[4:5, 0:1]
    # TODO(synk): output stays lane-width 1 (masked vst); slab is tiny so the
    # lane-dense-output rewrite was skipped per review priority.
    q_ref[...] = q.astype(q_ref.dtype)


@partial(jax.jit, static_argnames=("batch_tile",))
def critic_forward(inputs, actions, packed, batch_tile=512):
    """inputs: (B, input_dim), actions: (B, action_dim). Returns Q: (B, 1) f32."""
    w_first, w_rest, biases = packed
    D = w_first.shape[0]               # input_dim + action_dim
    Hp = w_rest.shape[-1]              # padded hidden dim
    B = inputs.shape[0]

    # Layout plumbing in the wrapper: one activation slab [x | a].
    xa = jnp.concatenate(
        [inputs.astype(jnp.float32), actions.astype(jnp.float32)], axis=1)

    # Large tiles amortize the ~0.35us per-grid-step overhead, but keep >= 2
    # grid steps whenever B allows it so v7x's second TensorCore gets work.
    half = _round_up(pl.cdiv(B, 2), 8)
    tb = max(8, min(_round_up(batch_tile, 8), half))
    b_pad = _round_up(B, tb)
    if b_pad != B:
        xa = jnp.pad(xa, ((0, b_pad - B), (0, 0)))

    # Explicit scoped-VMEM budget: resident weights/biases + double-buffered
    # activation/output tiles + f32 intermediates, with headroom.  Keeps v5e's
    # 16 MiB default scope from constraining internal tiling.
    wbytes = jnp.dtype(w_first.dtype).itemsize
    vmem_est = (
        2 * tb * max(D, 128) * 4                       # in tiles (double-buffered)
        + 2 * tb * 128 * 4                             # out tiles (lane-padded)
        + (D * 2 * Hp + 3 * Hp * Hp) * wbytes          # resident weights
        + 8 * 2 * Hp * 4                               # bias pack
        + tb * 6 * Hp * 4                              # h, h2, h3 + cast temps
    )
    vmem_limit = int(min(vmem_est * 1.5 + (1 << 20), 64 * 1024 * 1024))

    q = pl.pallas_call(
        _critic_kernel,
        out_shape=jax.ShapeDtypeStruct((b_pad, 1), jnp.float32),
        grid=(b_pad // tb,),
        in_specs=[
            pl.BlockSpec((tb, D), lambda i: (i, 0)),   # batch-tiled activations
            _resident_spec((D, 2 * Hp)),               # block-diag first-layer W
            _resident_spec((3 * Hp, Hp)),              # [w2 ; w3]
            _resident_spec((8, 2 * Hp)),               # biases + wq row + bq
        ],
        out_specs=pl.BlockSpec((tb, 1), lambda i: (i, 0)),
        compiler_params=pltpu.CompilerParams(
            dimension_semantics=("parallel",),         # v7x: 2 TCs on batch axis
            vmem_limit_bytes=vmem_limit,
        ),
    )(xa, w_first, w_rest, biases)
    return q[:B]


def init_params(key, input_dim, action_dim, hidden_dim):
    """Torch-layout params. Weights stored pre-transposed (in, out); biases (1, out)."""
    ks = jax.random.split(key, 10)

    def linear(kw, kb, fan_in, fan_out):
        bound = 1.0 / jnp.sqrt(jnp.float32(fan_in))
        w = jax.random.uniform(kw, (fan_in, fan_out), jnp.float32, -bound, bound)
        b = jax.random.uniform(kb, (1, fan_out), jnp.float32, -bound, bound)
        return w, b

    w1, b1 = linear(ks[0], ks[1], input_dim, hidden_dim)
    wa, ba = linear(ks[2], ks[3], action_dim, hidden_dim)
    w2, b2 = linear(ks[4], ks[5], hidden_dim + hidden_dim, hidden_dim)
    w3, b3 = linear(ks[6], ks[7], hidden_dim, hidden_dim)
    wq, bq = linear(ks[8], ks[9], hidden_dim, 1)
    return (w1, b1, wa, ba, w2, b2, w3, b3, wq, bq)


def pack_params(params, weight_dtype=jnp.bfloat16):
    """Pack 10 torch-layout params into 3 kernel operands.

    Hidden dim is padded to a multiple of 128 (Hp) so every static slice in the
    kernel lands on an (8,128) tile boundary.  Padding is exact (zeros).

    w_first: (D, 2Hp) block-diagonal -> [x|a] @ w_first == [x@w1 | a@wa]
    w_rest : (3Hp, Hp) rows = [w2 x-half ; w2 a-half ; w3]
    biases : (8, 2Hp) f32 rows = [b1|ba], [b2|0], [b3|0], [wq^T|0], [bq,0...], pad
    """
    (w1, b1, wa, ba, w2, b2, w3, b3, wq, bq) = params
    input_dim, H = w1.shape
    action_dim = wa.shape[0]
    D = input_dim + action_dim
    Hp = _round_up(H, 128)

    w_first = jnp.zeros((D, 2 * Hp), jnp.float32)
    w_first = w_first.at[:input_dim, :H].set(w1)
    w_first = w_first.at[input_dim:, Hp:Hp + H].set(wa)

    w_rest = jnp.zeros((3 * Hp, Hp), jnp.float32)
    w_rest = w_rest.at[0:H, 0:H].set(w2[:H])               # multiplies x-hidden
    w_rest = w_rest.at[Hp:Hp + H, 0:H].set(w2[H:])         # multiplies a-hidden
    w_rest = w_rest.at[2 * Hp:2 * Hp + H, 0:H].set(w3)

    biases = jnp.zeros((8, 2 * Hp), jnp.float32)
    biases = biases.at[0, 0:H].set(b1[0])
    biases = biases.at[0, Hp:Hp + H].set(ba[0])
    biases = biases.at[1, 0:H].set(b2[0])
    biases = biases.at[2, 0:H].set(b3[0])
    biases = biases.at[3, 0:H].set(wq[:, 0])                # Q weight row (f32)
    biases = biases.at[4, 0].set(bq[0, 0])

    return (w_first.astype(weight_dtype), w_rest.astype(weight_dtype), biases)


def critic_ref(inputs, actions, params):
    """Pure-JAX reference matching the PyTorch forward (fp32)."""
    (w1, b1, wa, ba, w2, b2, w3, b3, wq, bq) = params
    x = jnp.maximum(inputs @ w1 + b1, 0.0)
    a = jnp.maximum(actions @ wa + ba, 0.0)
    h = jnp.concatenate([x, a], axis=1)
    h = jnp.maximum(h @ w2 + b2, 0.0)
    h = jnp.maximum(h @ w3 + b3, 0.0)
    return h @ wq + bq


if __name__ == "__main__":
    B, input_dim, action_dim, hidden_dim = 8, 32, 8, 128

    key = jax.random.PRNGKey(0)
    k_in, k_act, k_par = jax.random.split(key, 3)

    inputs = jax.random.normal(k_in, (B, input_dim), jnp.float32)
    actions = jax.random.normal(k_act, (B, action_dim), jnp.float32)
    params = init_params(k_par, input_dim, action_dim, hidden_dim)
    q_expect = critic_ref(inputs, actions, params)

    # Exact fp32-weight path ----------------------------------------------------
    packed_f32 = pack_params(params, weight_dtype=jnp.float32)
    q = jax.block_until_ready(critic_forward(inputs, actions, packed_f32))
    assert q.shape == (B, 1)
    assert jnp.allclose(q, q_expect, atol=1e-4, rtol=1e-4), "fp32 mismatch vs reference"

    # Default path: bf16 weights, f32 accumulation (v6e/v7x) --------------------
    packed_bf16 = pack_params(params)
    q_bf16 = jax.block_until_ready(critic_forward(inputs, actions, packed_bf16))
    assert q_bf16.shape == (B, 1)
    assert jnp.allclose(q_bf16, q_expect, atol=1e-1, rtol=1e-1), "bf16 path mismatch"

    # Multi-step grid: padding + resident single-buffered weights across steps --
    B2 = 100
    k2a, k2b = jax.random.split(jax.random.PRNGKey(1))
    inputs2 = jax.random.normal(k2a, (B2, input_dim), jnp.float32)
    actions2 = jax.random.normal(k2b, (B2, action_dim), jnp.float32)
    q2 = jax.block_until_ready(
        critic_forward(inputs2, actions2, packed_f32, batch_tile=32))
    q2_expect = critic_ref(inputs2, actions2, params)
    assert q2.shape == (B2, 1)
    assert jnp.allclose(q2, q2_expect, atol=1e-4, rtol=1e-4), "tiled-grid mismatch"

    print("KERNEL_OK")
</pallas_src>

<mosaic_0001>
module attributes {stable_mosaic.version = 11 : i64} {
  func.func @_critic_kernel(%arg0: i32, %arg1: memref<8x40xf32, #tpu.memory_space<vmem>>, %arg2: memref<40x256xf32, #tpu.memory_space<vmem>>, %arg3: memref<384x128xf32, #tpu.memory_space<vmem>>, %arg4: memref<8x256xf32, #tpu.memory_space<vmem>>, %arg5: memref<8x1xf32, #tpu.memory_space<vmem>>) attributes {dimension_semantics = [#tpu.dimension_semantics<parallel>], iteration_bounds = array<i64: 1>, scalar_prefetch = 0 : i64, scratch_operands = 0 : i64, tpu.core_type = #tpu.core_type<tc>, window_params = [{transform_indices = @transform_0, window_bounds = array<i64: 8, 40>}, {pipeline_mode = #tpu.pipeline_mode<synchronous>, transform_indices = @transform_1, window_bounds = array<i64: 40, 256>}, {pipeline_mode = #tpu.pipeline_mode<synchronous>, transform_indices = @transform_2, window_bounds = array<i64: 384, 128>}, {pipeline_mode = #tpu.pipeline_mode<synchronous>, transform_indices = @transform_3, window_bounds = array<i64: 8, 256>}, {transform_indices = @transform_4, window_bounds = array<i64: 8, 1>}]} {
    %c0 = arith.constant 0 : index
    %c0_0 = arith.constant 0 : index
    %0 = vector.load %arg1[%c0, %c0_0] : memref<8x40xf32, #tpu.memory_space<vmem>>, vector<8x40xf32>
    %c0_1 = arith.constant 0 : index
    %c0_2 = arith.constant 0 : index
    %1 = vector.load %arg2[%c0_1, %c0_2] : memref<40x256xf32, #tpu.memory_space<vmem>>, vector<40x256xf32>
    %cst = arith.constant dense<0.000000e+00> : vector<8x256xf32>
    %2 = tpu.matmul %0, %1, %cst {dimension_numbers = #tpu.dot_dimension_numbers<[1], [0], [0], [1], [0, 0, 1, 1], [], []>} : vector<8x40xf32>, vector<40x256xf32>, vector<8x256xf32> -> vector<8x256xf32>
    %c0_3 = arith.constant 0 : index
    %c0_4 = arith.constant 0 : index
    %3 = vector.load %arg4[%c0_3, %c0_4] : memref<8x256xf32, #tpu.memory_space<vmem>>, vector<1x256xf32>
    %4 = vector.broadcast %3 : vector<1x256xf32> to vector<8x256xf32>
    %5 = arith.addf %2, %4 : vector<8x256xf32>
    %cst_5 = arith.constant 0.000000e+00 : f32
    %6 = vector.broadcast %cst_5 : f32 to vector<8x256xf32>
    %7 = arith.maximumf %5, %6 : vector<8x256xf32>
    %c0_6 = arith.constant 0 : index
    %c0_7 = arith.constant 0 : index
    %8 = vector.load %arg3[%c0_6, %c0_7] : memref<384x128xf32, #tpu.memory_space<vmem>>, vector<256x128xf32>
    %cst_8 = arith.constant dense<0.000000e+00> : vector<8x128xf32>
    %9 = tpu.matmul %7, %8, %cst_8 {dimension_numbers = #tpu.dot_dimension_numbers<[1], [0], [0], [1], [0, 0, 1, 1], [], []>} : vector<8x256xf32>, vector<256x128xf32>, vector<8x128xf32> -> vector<8x128xf32>
    %c1 = arith.constant 1 : index
    %c0_9 = arith.constant 0 : index
    %10 = vector.load %arg4[%c1, %c0_9] : memref<8x256xf32, #tpu.memory_space<vmem>>, vector<1x128xf32>
    %11 = vector.broadcast %10 : vector<1x128xf32> to vector<8x128xf32>
    %12 = arith.addf %9, %11 : vector<8x128xf32>
    %cst_10 = arith.constant 0.000000e+00 : f32
    %13 = vector.broadcast %cst_10 : f32 to vector<8x128xf32>
    %14 = arith.maximumf %12, %13 : vector<8x128xf32>
    %c256 = arith.constant 256 : index
    %c0_11 = arith.constant 0 : index
    %15 = vector.load %arg3[%c256, %c0_11] : memref<384x128xf32, #tpu.memory_space<vmem>>, vector<128x128xf32>
    %cst_12 = arith.constant dense<0.000000e+00> : vector<8x128xf32>
    %16 = tpu.matmul %14, %15, %cst_12 {dimension_numbers = #tpu.dot_dimension_numbers<[1], [0], [0], [1], [0, 0, 1, 1], [], []>} : vector<8x128xf32>, vector<128x128xf32>, vector<8x128xf32> -> vector<8x128xf32>
    %c2 = arith.constant 2 : index
    %c0_13 = arith.constant 0 : index
    %17 = vector.load %arg4[%c2, %c0_13] : memref<8x256xf32, #tpu.memory_space<vmem>>, vector<1x128xf32>
    %18 = vector.broadcast %17 : vector<1x128xf32> to vector<8x128xf32>
    %19 = arith.addf %16, %18 : vector<8x128xf32>
    %cst_14 = arith.constant 0.000000e+00 : f32
    %20 = vector.broadcast %cst_14 : f32 to vector<8x128xf32>
    %21 = arith.maximumf %19, %20 : vector<8x128xf32>
    %c3 = arith.constant 3 : index
    %c0_15 = arith.constant 0 : index
    %22 = vector.load %arg4[%c3, %c0_15] : memref<8x256xf32, #tpu.memory_space<vmem>>, vector<1x128xf32>
    %23 = vector.broadcast %22 : vector<1x128xf32> to vector<8x128xf32>
    %24 = arith.mulf %21, %23 : vector<8x128xf32>
    %cst_16 = arith.constant dense<0.000000e+00> : vector<8xf32>
    %25 = vector.multi_reduction <add>, %24, %cst_16 [1] : vector<8x128xf32> to vector<8xf32>
    %26 = vector.shape_cast %25 : vector<8xf32> to vector<8x1xf32>
    %c4 = arith.constant 4 : index
    %c0_17 = arith.constant 0 : index
    %27 = vector.load %arg4[%c4, %c0_17] : memref<8x256xf32, #tpu.memory_space<vmem>>, vector<1x1xf32>
    %28 = vector.broadcast %27 : vector<1x1xf32> to vector<8x1xf32>
    %29 = arith.addf %26, %28 : vector<8x1xf32>
    %c0_18 = arith.constant 0 : index
    %c0_19 = arith.constant 0 : index
    %30 = vector.load %arg5[%c0_18, %c0_19] : memref<8x1xf32, #tpu.memory_space<vmem>>, vector<8x1xf32>
    tpu.vector_store %arg5[%c0_18, %c0_19], %29 {strides = array<i32>} : memref<8x1xf32, #tpu.memory_space<vmem>>, vector<8x1xf32>,
    return
  }
  func.func @transform_0(%arg0: i32) -> (i32, i32) {
    %c0_i32 = arith.constant 0 : i32
    %c0_i32_0 = arith.constant 0 : i32
    return %arg0, %c0_i32 : i32, i32
  }
  func.func @transform_1(%arg0: i32) -> (i32, i32) {
    %c0_i32 = arith.constant 0 : i32
    %c0_i32_0 = arith.constant 0 : i32
    %c0_i32_1 = arith.constant 0 : i32
    return %c0_i32, %c0_i32_0 : i32, i32
  }
  func.func @transform_2(%arg0: i32) -> (i32, i32) {
    %c0_i32 = arith.constant 0 : i32
    %c0_i32_0 = arith.constant 0 : i32
    %c0_i32_1 = arith.constant 0 : i32
    return %c0_i32, %c0_i32_0 : i32, i32
  }
  func.func @transform_3(%arg0: i32) -> (i32, i32) {
    %c0_i32 = arith.constant 0 : i32
    %c0_i32_0 = arith.constant 0 : i32
    %c0_i32_1 = arith.constant 0 : i32
    return %c0_i32, %c0_i32_0 : i32, i32
  }
  func.func @transform_4(%arg0: i32) -> (i32, i32) {
    %c0_i32 = arith.constant 0 : i32
    %c0_i32_0 = arith.constant 0 : i32
    return %arg0, %c0_i32 : i32, i32
  }
}

</mosaic_0001>

<llo_original>
// kernel: critic_forward.1
$region0: #{critic_forward.1}
  #allocation0 [shape = 'u32[]', space=smem, size = 0x4, offset = 0x4, fixed_abs, tag = 'smem constant byte address 0x4 - core index']
  #allocation1 [shape = 'u32[144,128]{1,0:T(1,128)}', space=vmem, size = 0x12000, scoped, tag = 'internal scratch']
  %s0 = inlined_call_operand.vmem [shape: f32[8,40], index: 0, kind: input, shape index: {}]
  %s1 = inlined_call_operand.hbm [shape: f32[40,256], index: 1, kind: input, shape index: {}]
  %s2 = inlined_call_operand.hbm [shape: f32[384,128], index: 2, kind: input, shape index: {}]
  %s3 = inlined_call_operand.vmem [shape: f32[8,256], index: 3, kind: input, shape index: {}]
  %s4 = inlined_call_operand.vmem [shape: f32[8,1], index: 4, kind: output, shape index: {}]
  %s5 = sld [smem:[#allocation0]]
  $region34: #{critic_forward.1} parent=0
    _
  %s7 = ssub.s32 1, %s5
  %s8 = scalar_select 0, %s7, %s5
  $region1: #{critic_forward.1} parent=0
    #allocation2 [shape = 'u8[40960]{0}', space=vmem, size = 0xa000, scoped, tag = 'input window, operand 1, single buffered']
    #allocation3 [shape = 's32[1]{0}', space=sflag, size = 0x4, scoped, tag = 'scoped memory for critic_forward.1']
    #allocation4 [shape = 'u8[196608]{0}', space=vmem, size = 0x30000, scoped, tag = 'input window, operand 2, single buffered']
    #allocation5 [shape = 's32[1]{0}', space=sflag, size = 0x4, scoped, tag = 'scoped memory for critic_forward.1']
    %9 = vsyncpa [#allocation3], 0
    %10 = vsyncpa [#allocation5], 0
    // Predicated region
    $region2: #{critic_forward.1} parent=1 // pred_check
      _
    $region3: #{critic_forward.1} parent=1 // pred_check_branch
      %12 = sbr.rel (0) target = $region5
    $region4: #{critic_forward.1} parent=1 // pred_region
      _
    $region5: #{critic_forward.1} parent=1 // pred_fallthru
      _
    // Predicated region
    $region6: #{critic_forward.1} parent=1 // pred_check
      _
    $region7: #{critic_forward.1} parent=1 // pred_check_branch
      %14 = sbr.rel (0) target = $region9
    $region8: #{critic_forward.1} parent=1 // pred_region
      %s16 = ssub.s32 1280, 1280
      %17 = vsyncadd [#allocation3], %s16
      %s18 = sshll.u32 [#allocation2], 4
      %s19 = int_to_ptr.vmem [resolvable:$true] %s18
      %24 = dma.hbm_to_vmem [thread:$0]  %s1, 1280, %s19, [#allocation3], 256, 256, 16
    $region9: #{critic_forward.1} parent=1 // pred_fallthru
      _
    // Predicated region
    $region10: #{critic_forward.1} parent=1 // pred_check
      _
    $region11: #{critic_forward.1} parent=1 // pred_check_branch
      %26 = sbr.rel (0) target = $region13
    $region12: #{critic_forward.1} parent=1 // pred_region
      %s28 = ssub.s32 6144, 6144
      %29 = vsyncadd [#allocation5], %s28
      %s30 = sshll.u32 [#allocation4], 4
      %s31 = int_to_ptr.vmem [resolvable:$true] %s30
      %36 = dma.hbm_to_vmem [thread:$0]  %s2, 6144, %s31, [#allocation5], 128, 128, 8
    $region13: #{critic_forward.1} parent=1 // pred_fallthru
      _
    // Predicated region
    $region14: #{critic_forward.1} parent=1 // pred_check
      _
    $region15: #{critic_forward.1} parent=1 // pred_check_branch
      %38 = sbr.rel (0) target = $region17
    $region16: #{critic_forward.1} parent=1 // pred_region
      _
    $region17: #{critic_forward.1} parent=1 // pred_fallthru
      _
    // Predicated region
    $region18: #{critic_forward.1} parent=1 // pred_check
      _
    $region19: #{critic_forward.1} parent=1 // pred_check_branch
      %40 = sbr.rel (0) target = $region21
    $region20: #{critic_forward.1} parent=1 // pred_region
      %41 = dma.done [#allocation3], 1280
    $region21: #{critic_forward.1} parent=1 // pred_fallthru
      _
    // Predicated region
    $region22: #{critic_forward.1} parent=1 // pred_check
      _
    $region23: #{critic_forward.1} parent=1 // pred_check_branch
      %43 = sbr.rel (0) target = $region25
    $region24: #{critic_forward.1} parent=1 // pred_region
      %44 = dma.done [#allocation5], 6144
    $region25: #{critic_forward.1} parent=1 // pred_fallthru
      _
    %v45 = vld [vmem:[%s0] sm:$0xff]
    %v46 = vld [vmem:[#allocation2] sm:$0xff]
    %v47 = vld [vmem:[#allocation2 + $0x8] sm:$0xff]
    %v48 = vld [vmem:[#allocation2 + $0x10] sm:$0xff]
    %v49 = vld [vmem:[#allocation2 + $0x18] sm:$0xff]
    %v50 = vld [vmem:[#allocation2 + $0x20] sm:$0xff]
    %v51 = vld [vmem:[#allocation2 + $0x28] sm:$0xff]
    %v52 = vld [vmem:[#allocation2 + $0x30] sm:$0xff]
    %v53 = vld [vmem:[#allocation2 + $0x38] sm:$0xff]
    %v54 = vld [vmem:[#allocation2 + $0x40] sm:$0xff]
    %v55 = vld [vmem:[#allocation2 + $0x48] sm:$0xff]
    %v56 = vld [vmem:[%s3] ss:$8 sm:$0x3]
    %v58 = vlaneseq
    %v59 = vshrl.u32 %v58, 7
    %v60 = vsub.s32 0, %v59
    %v61 = vrot.slane %v56, %v60
    %v62 = vlaneseq
    %v63 = vshrl.u32 %v62, 7
    %v64 = vsub.s32 1, %v63
    %v65 = vrot.slane %v56, %v64
    %vm68 = vcmask 326656
    %v70 = vsel %vm68, %v45, 0
    %72 = vmatprep.subr.mxu0 %v47
    %73 = vmatpush1.msra.mxu0 %v46
    %74 = vmatprep.subr.mxu0 %v49
    %75 = vmatpush1.msra.mxu0 %v48
    %76 = vmatprep.subr.mxu0 %v51
    %77 = vmatpush1.msra.mxu0 %v50
    %78 = vmatprep.subr.mxu0 %v53
    %79 = vmatpush1.msra.mxu0 %v52
    %80 = vmatprep.subr.mxu0 %v55
    %81 = vmatpush1.msra.mxu0 %v54
    %82 = vmatprep.subr.mxu0 0.0
    %83 = vmatpush1.msra.mxu0 0.0
    %84 = vmatprep.subr.mxu0 0.0
    %85 = vmatpush1.msra.mxu0 0.0
    %86 = vmatprep.subr.mxu0 0.0
    %87 = vmatpush1.msra.mxu0 0.0
    %88 = vmatprep.subr.mxu0 0.0
    %89 = vmatpush1.msra.mxu0 0.0
    %90 = vmatprep.subr.mxu0 0.0
    %91 = vmatpush1.msra.mxu0 0.0
    %92 = vmatprep.subr.mxu0 0.0
    %93 = vmatpush1.msra.mxu0 0.0
    %94 = vmatprep.subr.mxu0 0.0
    %95 = vmatpush1.msra.mxu0 0.0
    %96 = vmatprep.subr.mxu0 0.0
    %97 = vmatpush1.msra.mxu0 0.0
    %98 = vmatprep.subr.mxu0 0.0
    %99 = vmatpush1.msra.mxu0 0.0
    %100 = vmatprep.subr.mxu0 0.0
    %101 = vmatpush1.msra.mxu0 0.0
    %102 = vmatprep.subr.mxu0 0.0
    %103 = vmatpush1.msra.mxu0 0.0
    %104 = vmatprep.subr.mxu0 0.0
    %105 = vmatpush1.msra.mxu0 0.0
    %106 = vmatprep.subr.mxu0 0.0
    %107 = vmatpush1.msra.mxu0 0.0
    %108 = vmatprep.subr.mxu0 0.0
    %109 = vmatpush1.msra.mxu0 0.0
    %110 = vmatprep.subr.mxu0 0.0
    %111 = vmatpush1.msra.mxu0 0.0
    %112 = vmatprep.subr.mxu0 0.0
    %113 = vmatpush1.msra.mxu0 0.0
    %114 = vmatprep.subr.mxu0 0.0
    %115 = vmatpush1.msra.mxu0 0.0
    %116 = vmatprep.subr.mxu0 0.0
    %117 = vmatpush1.msra.mxu0 0.0
    %118 = vmatprep.subr.mxu0 0.0
    %119 = vmatpush1.msra.mxu0 0.0
    %120 = vmatprep.subr.mxu0 0.0
    %121 = vmatpush1.msra.mxu0 0.0
    %122 = vmatprep.subr.mxu0 0.0
    %123 = vmatpush1.msra.mxu0 0.0
    %124 = vmatprep.subr.mxu0 0.0
    %125 = vmatpush1.msra.mxu0 0.0
    %126 = vmatprep.subr.mxu0 0.0
    %127 = vmatpush1.msra.mxu0 0.0
    %128 = vmatprep.subr.mxu0 0.0
    %129 = vmatpush1.msra.mxu0 0.0
    %130 = vmatprep.subr.mxu0 0.0
    %131 = vmatpush1.msra.mxu0 0.0
    %132 = vmatprep.subr.mxu0 0.0
    %133 = vmatpush1.msra.mxu0 0.0
    %134 = vmatprep.subr.mxu0 0.0
    %135 = vmatpush1.msra.mxu0 0.0
    %136 = vmatprep.mubr.f32.mxu0 0.0
    %137 = vmatmul.mubr.f32.gmra.mrb[0].mxu0 %v70
    %v138 = vpop.f32.mrb[0].mxu0
    %v139 = vadd.f32 %v61, %v138
    %v140 = vpop.f32.mrb[0].mxu0
    %v141 = vadd.f32 %v65, %v140
    %142 = vdwg.mxu0
    %v143 = vmax.f32 %v139, 0.0
    %v144 = vmax.f32 %v141, 0.0
    %v145 = vld [vmem:[#allocation4] sm:$0xff]
    %v146 = vld [vmem:[#allocation4 + $0x8] sm:$0xff]
    %v147 = vld [vmem:[#allocation4 + $0x10] sm:$0xff]
    %v148 = vld [vmem:[#allocation4 + $0x18] sm:$0xff]
    %v149 = vld [vmem:[#allocation4 + $0x20] sm:$0xff]
    %v150 = vld [vmem:[#allocation4 + $0x28] sm:$0xff]
    %v151 = vld [vmem:[#allocation4 + $0x30] sm:$0xff]
    %v152 = vld [vmem:[#allocation4 + $0x38] sm:$0xff]
    %v153 = vld [vmem:[#allocation4 + $0x40] sm:$0xff]
    %v154 = vld [vmem:[#allocation4 + $0x48] sm:$0xff]
    %v155 = vld [vmem:[#allocation4 + $0x50] sm:$0xff]
    %v156 = vld [vmem:[#allocation4 + $0x58] sm:$0xff]
    %v157 = vld [vmem:[#allocation4 + $0x60] sm:$0xff]
    %v158 = vld [vmem:[#allocation4 + $0x68] sm:$0xff]
    %v159 = vld [vmem:[#allocation4 + $0x70] sm:$0xff]
    %v160 = vld [vmem:[#allocation4 + $0x78] sm:$0xff]
    %v161 = vld [vmem:[#allocation4 + $0x80] sm:$0xff]
    %v162 = vld [vmem:[#allocation4 + $0x88] sm:$0xff]
    %v163 = vld [vmem:[#allocation4 + $0x90] sm:$0xff]
    %v164 = vld [vmem:[#allocation4 + $0x98] sm:$0xff]
    %v165 = vld [vmem:[#allocation4 + $0xa0] sm:$0xff]
    %v166 = vld [vmem:[#allocation4 + $0xa8] sm:$0xff]
    %v167 = vld [vmem:[#allocation4 + $0xb0] sm:$0xff]
    %v168 = vld [vmem:[#allocation4 + $0xb8] sm:$0xff]
    %v169 = vld [vmem:[#allocation4 + $0xc0] sm:$0xff]
    %v170 = vld [vmem:[#allocation4 + $0xc8] sm:$0xff]
    %v171 = vld [vmem:[#allocation4 + $0xd0] sm:$0xff]
    %v172 = vld [vmem:[#allocation4 + $0xd8] sm:$0xff]
    %v173 = vld [vmem:[#allocation4 + $0xe0] sm:$0xff]
    %v174 = vld [vmem:[#allocation4 + $0xe8] sm:$0xff]
    %v175 = vld [vmem:[#allocation4 + $0xf0] sm:$0xff]
    %v176 = vld [vmem:[#allocation4 + $0xf8] sm:$0xff]
    %v177 = vld [vmem:[%s3 + $0x1] ss:$0 sm:$0xff]
    %178 = vmatprep.subr.mxu0 0.0
    %179 = vmatpush1.msra.mxu0 %v145
    %180 = vmatprep.subr.mxu0 0.0
    %181 = vmatpush1.msra.mxu0 %v146
    %182 = vmatprep.subr.mxu0 0.0
    %183 = vmatpush1.msra.mxu0 %v147
    %184 = vmatprep.subr.mxu0 0.0
    %185 = vmatpush1.msra.mxu0 %v148
    %186 = vmatprep.subr.mxu0 0.0
    %187 = vmatpush1.msra.mxu0 %v149
    %188 = vmatprep.subr.mxu0 0.0
    %189 = vmatpush1.msra.mxu0 %v150
    %190 = vmatprep.subr.mxu0 0.0
    %191 = vmatpush1.msra.mxu0 %v151
    %192 = vmatprep.subr.mxu0 0.0
    %193 = vmatpush1.msra.mxu0 %v152
    %194 = vmatprep.subr.mxu0 0.0
    %195 = vmatpush1.msra.mxu0 %v153
    %196 = vmatprep.subr.mxu0 0.0
    %197 = vmatpush1.msra.mxu0 %v154
    %198 = vmatprep.subr.mxu0 0.0
    %199 = vmatpush1.msra.mxu0 %v155
    %200 = vmatprep.subr.mxu0 0.0
    %201 = vmatpush1.msra.mxu0 %v156
    %202 = vmatprep.subr.mxu0 0.0
    %203 = vmatpush1.msra.mxu0 %v157
    %204 = vmatprep.subr.mxu0 0.0
    %205 = vmatpush1.msra.mxu0 %v158
    %206 = vmatprep.subr.mxu0 0.0
    %207 = vmatpush1.msra.mxu0 %v159
    %208 = vmatprep.subr.mxu0 0.0
    %209 = vmatpush1.msra.mxu0 %v160
    %210 = vmatprep.subr.mxu0 0.0
    %211 = vmatpush1.msra.mxu0 %v161
    %212 = vmatprep.subr.mxu0 0.0
    %213 = vmatpush1.msra.mxu0 %v162
    %214 = vmatprep.subr.mxu0 0.0
    %215 = vmatpush1.msra.mxu0 %v163
    %216 = vmatprep.subr.mxu0 0.0
    %217 = vmatpush1.msra.mxu0 %v164
    %218 = vmatprep.subr.mxu0 0.0
    %219 = vmatpush1.msra.mxu0 %v165
    %220 = vmatprep.subr.mxu0 0.0
    %221 = vmatpush1.msra.mxu0 %v166
    %222 = vmatprep.subr.mxu0 0.0
    %223 = vmatpush1.msra.mxu0 %v167
    %224 = vmatprep.subr.mxu0 0.0
    %225 = vmatpush1.msra.mxu0 %v168
    %226 = vmatprep.subr.mxu0 0.0
    %227 = vmatpush1.msra.mxu0 %v169
    %228 = vmatprep.subr.mxu0 0.0
    %229 = vmatpush1.msra.mxu0 %v170
    %230 = vmatprep.subr.mxu0 0.0
    %231 = vmatpush1.msra.mxu0 %v171
    %232 = vmatprep.subr.mxu0 0.0
    %233 = vmatpush1.msra.mxu0 %v172
    %234 = vmatprep.subr.mxu0 0.0
    %235 = vmatpush1.msra.mxu0 %v173
    %236 = vmatprep.subr.mxu0 0.0
    %237 = vmatpush1.msra.mxu0 %v174
    %238 = vmatprep.subr.mxu0 0.0
    %239 = vmatpush1.msra.mxu0 %v175
    %240 = vmatprep.subr.mxu0 0.0
    %241 = vmatpush1.msra.mxu0 %v176
    %242 = vmatprep.mubr.f32.mxu0 %v144
    %243 = vmatmul.mubr.f32.gmra.mrb[0].mxu0 %v143
    %v244 = vpop.f32.mrb[0].mxu0
    %v245 = vadd.f32 %v177, %v244
    %v246 = vpop.f32.mrb[0].mxu0
    %247 = vdwg.mxu0
    %v248 = vmax.f32 %v245, 0.0
    %v249 = vld [vmem:[#allocation4 + $0x100] sm:$0xff]
    %v250 = vld [vmem:[#allocation4 + $0x108] sm:$0xff]
    %v251 = vld [vmem:[#allocation4 + $0x110] sm:$0xff]
    %v252 = vld [vmem:[#allocation4 + $0x118] sm:$0xff]
    %v253 = vld [vmem:[#allocation4 + $0x120] sm:$0xff]
    %v254 = vld [vmem:[#allocation4 + $0x128] sm:$0xff]
    %v255 = vld [vmem:[#allocation4 + $0x130] sm:$0xff]
    %v256 = vld [vmem:[#allocation4 + $0x138] sm:$0xff]
    %v257 = vld [vmem:[#allocation4 + $0x140] sm:$0xff]
    %v258 = vld [vmem:[#allocation4 + $0x148] sm:$0xff]
    %v259 = vld [vmem:[#allocation4 + $0x150] sm:$0xff]
    %v260 = vld [vmem:[#allocation4 + $0x158] sm:$0xff]
    %v261 = vld [vmem:[#allocation4 + $0x160] sm:$0xff]
    %v262 = vld [vmem:[#allocation4 + $0x168] sm:$0xff]
    %v263 = vld [vmem:[#allocation4 + $0x170] sm:$0xff]
    %v264 = vld [vmem:[#allocation4 + $0x178] sm:$0xff]
    %v265 = vld [vmem:[%s3 + $0x2] ss:$0 sm:$0xff]
    %266 = vmatprep.subr.mxu0 0.0
    %267 = vmatpush1.msra.mxu0 %v249
    %268 = vmatprep.subr.mxu0 0.0
    %269 = vmatpush1.msra.mxu0 %v250
    %270 = vmatprep.subr.mxu0 0.0
    %271 = vmatpush1.msra.mxu0 %v251
    %272 = vmatprep.subr.mxu0 0.0
    %273 = vmatpush1.msra.mxu0 %v252
    %274 = vmatprep.subr.mxu0 0.0
    %275 = vmatpush1.msra.mxu0 %v253
    %276 = vmatprep.subr.mxu0 0.0
    %277 = vmatpush1.msra.mxu0 %v254
    %278 = vmatprep.subr.mxu0 0.0
    %279 = vmatpush1.msra.mxu0 %v255
    %280 = vmatprep.subr.mxu0 0.0
    %281 = vmatpush1.msra.mxu0 %v256
    %282 = vmatprep.subr.mxu0 0.0
    %283 = vmatpush1.msra.mxu0 %v257
    %284 = vmatprep.subr.mxu0 0.0
    %285 = vmatpush1.msra.mxu0 %v258
    %286 = vmatprep.subr.mxu0 0.0
    %287 = vmatpush1.msra.mxu0 %v259
    %288 = vmatprep.subr.mxu0 0.0
    %289 = vmatpush1.msra.mxu0 %v260
    %290 = vmatprep.subr.mxu0 0.0
    %291 = vmatpush1.msra.mxu0 %v261
    %292 = vmatprep.subr.mxu0 0.0
    %293 = vmatpush1.msra.mxu0 %v262
    %294 = vmatprep.subr.mxu0 0.0
    %295 = vmatpush1.msra.mxu0 %v263
    %296 = vmatprep.subr.mxu0 0.0
    %297 = vmatpush1.msra.mxu0 %v264
    %298 = vmatprep.subr.mxu0 0.0
    %299 = vmatpush1.msra.mxu0 0.0
    %300 = vmatprep.subr.mxu0 0.0
    %301 = vmatpush1.msra.mxu0 0.0
    %302 = vmatprep.subr.mxu0 0.0
    %303 = vmatpush1.msra.mxu0 0.0
    %304 = vmatprep.subr.mxu0 0.0
    %305 = vmatpush1.msra.mxu0 0.0
    %306 = vmatprep.subr.mxu0 0.0
    %307 = vmatpush1.msra.mxu0 0.0
    %308 = vmatprep.subr.mxu0 0.0
    %309 = vmatpush1.msra.mxu0 0.0
    %310 = vmatprep.subr.mxu0 0.0
    %311 = vmatpush1.msra.mxu0 0.0
    %312 = vmatprep.subr.mxu0 0.0
    %313 = vmatpush1.msra.mxu0 0.0
    %314 = vmatprep.subr.mxu0 0.0
    %315 = vmatpush1.msra.mxu0 0.0
    %316 = vmatprep.subr.mxu0 0.0
    %317 = vmatpush1.msra.mxu0 0.0
    %318 = vmatprep.subr.mxu0 0.0
    %319 = vmatpush1.msra.mxu0 0.0
    %320 = vmatprep.subr.mxu0 0.0
    %321 = vmatpush1.msra.mxu0 0.0
    %322 = vmatprep.subr.mxu0 0.0
    %323 = vmatpush1.msra.mxu0 0.0
    %324 = vmatprep.subr.mxu0 0.0
    %325 = vmatpush1.msra.mxu0 0.0
    %326 = vmatprep.subr.mxu0 0.0
    %327 = vmatpush1.msra.mxu0 0.0
    %328 = vmatprep.subr.mxu0 0.0
    %329 = vmatpush1.msra.mxu0 0.0
    %330 = vmatprep.mubr.f32.mxu0 0.0
    %331 = vmatmul.mubr.f32.gmra.mrb[0].mxu0 %v248
    %v332 = vpop.f32.mrb[0].mxu0
    %v333 = vadd.f32 %v265, %v332
    %v334 = vpop.f32.mrb[0].mxu0
    %335 = vdwg.mxu0
    %v336 = vmax.f32 %v333, 0.0
    %v337 = vld [vmem:[%s3 + $0x3] ss:$0 sm:$0xff]
    %v338 = vmul.f32 %v336, %v337
    %339 = vadd.xlane.f32.xlu0 %v338
    %v340 = vpop.xlane.xlu0 %339
    %v341 = vld [vmem:[%s3 + $0x4] ss:$0 sm:$0xff]
    %v342 = vadd.f32 %v340, %v341
    %vm343 = vcmask 7168
    %344 = vst.msk [vmem:[%s4] sm:$0xff] %vm343, %v342
    // Predicated region
    $region26: #{critic_forward.1} parent=1 // pred_check
      _
    $region27: #{critic_forward.1} parent=1 // pred_check_branch
      %346 = sbr.rel (0) target = $region29
    $region28: #{critic_forward.1} parent=1 // pred_region
      _
    $region29: #{critic_forward.1} parent=1 // pred_fallthru
      _
    // Predicated region
    $region30: #{critic_forward.1} parent=1 // pred_check
      _
    $region31: #{critic_forward.1} parent=1 // pred_check_branch
      %348 = sbr.rel (0) target = $region33
    $region32: #{critic_forward.1} parent=1 // pred_region
      _
    $region33: #{critic_forward.1} parent=1 // pred_fallthru
      _
    %349 = vsyncpa [#allocation3], 1
    %350 = vsyncpa [#allocation5], 1

</llo_original>
